<compile_context>
chip_gen: v7x
topology: tpu7x:2x2x1
jax: 0.10.0
libtpu: 0.0.40
codegen_flags: <defaults>
</compile_context>

<pallas_src>
import functools
import math

import jax
import jax.numpy as jnp
from jax.experimental import pallas as pl
from jax.experimental.pallas import tpu as pltpu


def _pe_add_kernel(x_ref, pe_ref, o_ref, *, batch):
    """x_ref/o_ref: (ts*B, D) flattened rows; pe_ref: (ts, D)."""
    pe = pe_ref[...]
    if batch > 1:
        # Flattened row s*B + b needs pe row s -> repeat each pe row B times
        # (sublane broadcast + collapse; cheap, hidden under the DMAs).
        pe = jnp.repeat(pe, batch, axis=0)
    o_ref[...] = x_ref[...] + pe


def make_positional_encoding(d_model, max_len=5000):
    """Same buffer as the PyTorch module, kept 2-D (max_len, d_model)."""
    position = jnp.arange(max_len, dtype=jnp.float32)[:, None]
    div_term = jnp.exp(
        jnp.arange(0, d_model, 2, dtype=jnp.float32)
        * (-(math.log(10000.0) / d_model)))
    pe = jnp.zeros((max_len, d_model), dtype=jnp.float32)
    pe = pe.at[:, 0::2].set(jnp.sin(position * div_term))
    pe = pe.at[:, 1::2].set(jnp.cos(position * div_term))
    return pe  # (max_len, d_model)


def _round_up(v, m):
    return ((v + m - 1) // m) * m


def _pick_seq_tile(S, B, D, itemsize, target_block_bytes):
    """Rows of pe per grid step; the x block is (ts*B, D)."""
    if S < 16:
        return S  # single full-array block (full dims -> always layout-legal)
    # Size by bytes: ~target_block_bytes per x block.
    rows = max(8, target_block_bytes // (D * itemsize))       # flattened rows
    ts_bytes = max(8, (rows // max(B, 1)) // 8 * 8)
    # Keep >= 2 grid steps so the "parallel" axis can use both v7x TCs.
    ts_half = max(8, _round_up(-(-S // 2), 8))
    return min(ts_bytes, ts_half)


@functools.partial(
    jax.jit, static_argnames=("target_block_bytes", "min_pallas_bytes"))
def positional_encoding_forward(x, pe_table, *,
                                target_block_bytes=2 * 1024 * 1024,
                                min_pallas_bytes=32 * 1024):
    """x: (S, B, D) seq-first (PyTorch convention); pe_table: (max_len, D)."""
    S, B, D = x.shape
    pe = pe_table[:S].astype(x.dtype)  # (S, D); halves DMA bytes if x is bf16

    # Tiny-input fast path: launch overhead dwarfs the traffic.
    if S * B * D * x.dtype.itemsize < min_pallas_bytes:
        return x + pe[:, None, :]

    ts = _pick_seq_tile(S, B, D, x.dtype.itemsize, target_block_bytes)
    grid = (pl.cdiv(S, ts),)

    # Row-major flatten is free (contiguous) and makes every block a dense
    # (rows, 128) slab -> unmasked, unstrided loads/stores.
    x_flat = x.reshape(S * B, D)

    out_flat = pl.pallas_call(
        functools.partial(_pe_add_kernel, batch=B),
        out_shape=jax.ShapeDtypeStruct((S * B, D), x.dtype),
        grid=grid,
        in_specs=[
            pl.BlockSpec((ts * B, D), lambda i: (i, 0)),
            pl.BlockSpec((ts, D), lambda i: (i, 0)),
        ],
        out_specs=pl.BlockSpec((ts * B, D), lambda i: (i, 0)),
        compiler_params=pltpu.CompilerParams(
            dimension_semantics=("parallel",),
            vmem_limit_bytes=32 * 1024 * 1024),
    )(x_flat, pe)

    return out_flat.reshape(S, B, D)


if __name__ == "__main__":
    d_model, max_len = 128, 5000
    pe_table = make_positional_encoding(d_model, max_len)

    key = jax.random.PRNGKey(0)
    k0, k1 = jax.random.split(key)

    # Small shape (module's seq-first (S, B, D) convention); force Pallas path.
    S, B = 8, 2
    x = jax.random.normal(k0, (S, B, d_model), jnp.float32)
    out = jax.block_until_ready(
        positional_encoding_forward(x, pe_table, min_pallas_bytes=0))
    ref = x + pe_table[:S][:, None, :]
    assert out.shape == (S, B, d_model)
    assert bool(jnp.all(jnp.isfinite(out)))
    assert bool(jnp.allclose(out, ref, atol=1e-6, rtol=1e-6))

    # Larger shape: exercises the flattened layout + 2-step "parallel" grid.
    S2, B2 = 512, 4
    x2 = jax.random.normal(k1, (S2, B2, d_model), jnp.float32)
    out2 = jax.block_until_ready(positional_encoding_forward(x2, pe_table))
    ref2 = x2 + pe_table[:S2][:, None, :]
    assert bool(jnp.allclose(out2, ref2, atol=1e-6, rtol=1e-6))

    # Default tiny-input fast path (pure JAX add below the byte threshold).
    out3 = jax.block_until_ready(positional_encoding_forward(x, pe_table))
    assert bool(jnp.allclose(out3, ref, atol=1e-6, rtol=1e-6))

    print("KERNEL_OK")
</pallas_src>

<mosaic_0001>
module attributes {stable_mosaic.version = 11 : i64} {
  func.func @_pe_add_kernel(%arg0: i32, %arg1: memref<16x128xf32, #tpu.memory_space<vmem>>, %arg2: memref<8x128xf32, #tpu.memory_space<vmem>>, %arg3: memref<16x128xf32, #tpu.memory_space<vmem>>) attributes {dimension_semantics = [#tpu.dimension_semantics<parallel>], iteration_bounds = array<i64: 1>, scalar_prefetch = 0 : i64, scratch_operands = 0 : i64, tpu.core_type = #tpu.core_type<tc>, window_params = [{transform_indices = @transform_0, window_bounds = array<i64: 16, 128>}, {transform_indices = @transform_1, window_bounds = array<i64: 8, 128>}, {transform_indices = @transform_2, window_bounds = array<i64: 16, 128>}]} {
    %c0 = arith.constant 0 : index
    %c0_0 = arith.constant 0 : index
    %0 = vector.load %arg2[%c0, %c0_0] : memref<8x128xf32, #tpu.memory_space<vmem>>, vector<8x128xf32>
    %1 = vector.shape_cast %0 : vector<8x128xf32> to vector<8x1x128xf32>
    %2 = vector.broadcast %1 : vector<8x1x128xf32> to vector<8x2x128xf32>
    %3 = vector.shape_cast %2 : vector<8x2x128xf32> to vector<16x128xf32>
    %c0_1 = arith.constant 0 : index
    %c0_2 = arith.constant 0 : index
    %4 = vector.load %arg1[%c0_1, %c0_2] : memref<16x128xf32, #tpu.memory_space<vmem>>, vector<16x128xf32>
    %5 = arith.addf %4, %3 : vector<16x128xf32>
    %c0_3 = arith.constant 0 : index
    %c0_4 = arith.constant 0 : index
    %6 = vector.load %arg3[%c0_3, %c0_4] : memref<16x128xf32, #tpu.memory_space<vmem>>, vector<16x128xf32>
    tpu.vector_store %arg3[%c0_3, %c0_4], %5 {strides = array<i32>} : memref<16x128xf32, #tpu.memory_space<vmem>>, vector<16x128xf32>,
    return
  }
  func.func @transform_0(%arg0: i32) -> (i32, i32) {
    %c0_i32 = arith.constant 0 : i32
    %c0_i32_0 = arith.constant 0 : i32
    return %arg0, %c0_i32 : i32, i32
  }
  func.func @transform_1(%arg0: i32) -> (i32, i32) {
    %c0_i32 = arith.constant 0 : i32
    %c0_i32_0 = arith.constant 0 : i32
    return %arg0, %c0_i32 : i32, i32
  }
  func.func @transform_2(%arg0: i32) -> (i32, i32) {
    %c0_i32 = arith.constant 0 : i32
    %c0_i32_0 = arith.constant 0 : i32
    return %arg0, %c0_i32 : i32, i32
  }
}

</mosaic_0001>

<llo_original>
// kernel: positional_encoding_forward.1
$region0: #{positional_encoding_forward.1}
  #allocation0 [shape = 'u32[]', space=smem, size = 0x4, offset = 0x4, fixed_abs, tag = 'smem constant byte address 0x4 - core index']
  #allocation1 [shape = 'u32[144,128]{1,0:T(1,128)}', space=vmem, size = 0x12000, scoped, tag = 'internal scratch']
  %s0 = inlined_call_operand.hbm [shape: f32[16,128], index: 0, kind: input, shape index: {}]
  %s1 = inlined_call_operand.vmem [shape: f32[8,128], index: 1, kind: input, shape index: {}]
  %s2 = inlined_call_operand.hbm [shape: f32[16,128], index: 2, kind: output, shape index: {}]
  %s3 = sld [smem:[#allocation0]]
  $region22: #{positional_encoding_forward.1} parent=0
    _
  %s5 = ssub.s32 1, %s3
  %s6 = scalar_select 0, %s5, %s3
  $region1: #{positional_encoding_forward.1} parent=0
    #allocation2 [shape = 'u8[8192]{0}', space=vmem, size = 0x2000, scoped, tag = 'input window, operand 0, single buffered']
    #allocation3 [shape = 's32[1]{0}', space=sflag, size = 0x4, scoped, tag = 'scoped memory for positional_encoding_forward.1']
    #allocation4 [shape = 's32[1]{0}', space=sflag, size = 0x4, scoped, tag = 'scoped memory for positional_encoding_forward.1']
    #allocation5 [shape = 'u8[8192]{0}', space=vmem, size = 0x2000, scoped, tag = 'output window, operand 0, single buffered']
    %7 = vsyncpa [#allocation3], 0
    %8 = vsyncpa [#allocation4], 0
    // Predicated region
    $region2: #{positional_encoding_forward.1} parent=1 // pred_check
      _
    $region3: #{positional_encoding_forward.1} parent=1 // pred_check_branch
      %10 = sbr.rel (0) target = $region5
    $region4: #{positional_encoding_forward.1} parent=1 // pred_region
      %s12 = ssub.s32 256, 256
      %13 = vsyncadd [#allocation3], %s12
      %s14 = sshll.u32 [#allocation2], 4
      %s15 = int_to_ptr.vmem [resolvable:$true] %s14
      %20 = dma.hbm_to_vmem [thread:$0]  %s0, 256, %s15, [#allocation3], 128, 128, 8
    $region5: #{positional_encoding_forward.1} parent=1 // pred_fallthru
      _
    // Predicated region
    $region6: #{positional_encoding_forward.1} parent=1 // pred_check
      _
    $region7: #{positional_encoding_forward.1} parent=1 // pred_check_branch
      %22 = sbr.rel (0) target = $region9
    $region8: #{positional_encoding_forward.1} parent=1 // pred_region
      _
    $region9: #{positional_encoding_forward.1} parent=1 // pred_fallthru
      _
    // Predicated region
    $region10: #{positional_encoding_forward.1} parent=1 // pred_check
      _
    $region11: #{positional_encoding_forward.1} parent=1 // pred_check_branch
      %24 = sbr.rel (0) target = $region13
    $region12: #{positional_encoding_forward.1} parent=1 // pred_region
      %25 = dma.done [#allocation3], 256
    $region13: #{positional_encoding_forward.1} parent=1 // pred_fallthru
      _
    %v26 = vld [vmem:[%s1] sm:$0xff]
    %v28 = vcombine.high %v26, %v26
    %v30 = vunpack.c.l.s4 1966171168
    %v31 = vunpack.c.0.s8 %v30
    %v32 = vlaneseq
    %v33 = vshrl.u32 %v32, 7
    %v34 = vsub.s32 %v31, %v33
    %v35 = vrot.slane %v26, %v34
    %v37 = vunpack.c.l.s4 1966171168
    %v38 = vunpack.c.0.s8 %v37
    %v39 = vlaneseq
    %v40 = vshrl.u32 %v39, 7
    %v41 = vsub.s32 %v38, %v40
    %v42 = vrot.slane %v28, %v41
    %v43 = vcombine.high %v35, %v35
    %v44 = vcombine.high %v42, %v42
    %v46 = vunpack.c.l.s4 1966171168
    %v47 = vunpack.c.0.s8 %v46
    %v48 = vlaneseq
    %v49 = vshrl.u32 %v48, 7
    %v50 = vsub.s32 %v47, %v49
    %v51 = vrot.slane %v35, %v50
    %v53 = vunpack.c.l.s4 1966171168
    %v54 = vunpack.c.0.s8 %v53
    %v55 = vlaneseq
    %v56 = vshrl.u32 %v55, 7
    %v57 = vsub.s32 %v54, %v56
    %v58 = vrot.slane %v42, %v57
    %v60 = vunpack.c.l.s4 1966171168
    %v61 = vunpack.c.0.s8 %v60
    %v62 = vlaneseq
    %v63 = vshrl.u32 %v62, 7
    %v64 = vsub.s32 %v61, %v63
    %v65 = vrot.slane %v43, %v64
    %v67 = vunpack.c.l.s4 1966171168
    %v68 = vunpack.c.0.s8 %v67
    %v69 = vlaneseq
    %v70 = vshrl.u32 %v69, 7
    %v71 = vsub.s32 %v68, %v70
    %v72 = vrot.slane %v44, %v71
    %v73 = vcombine.high %v51, %v51
    %v74 = vcombine.high %v58, %v58
    %v75 = vcombine.high %v65, %v65
    %v76 = vcombine.high %v72, %v72
    %v77 = vlaneseq
    %v78 = vshrl.u32 %v77, 7
    %v79 = vsub.s32 0, %v78
    %v80 = vrot.slane %v51, %v79
    %v81 = vlaneseq
    %v82 = vshrl.u32 %v81, 7
    %v83 = vsub.s32 0, %v82
    %v84 = vrot.slane %v65, %v83
    %v85 = vlaneseq
    %v86 = vshrl.u32 %v85, 7
    %v87 = vsub.s32 0, %v86
    %v88 = vrot.slane %v73, %v87
    %v89 = vlaneseq
    %v90 = vshrl.u32 %v89, 7
    %v91 = vsub.s32 0, %v90
    %v92 = vrot.slane %v75, %v91
    %v93 = vlaneseq
    %v94 = vshrl.u32 %v93, 7
    %v95 = vsub.s32 0, %v94
    %v96 = vrot.slane %v58, %v95
    %v97 = vlaneseq
    %v98 = vshrl.u32 %v97, 7
    %v99 = vsub.s32 0, %v98
    %v100 = vrot.slane %v72, %v99
    %v101 = vlaneseq
    %v102 = vshrl.u32 %v101, 7
    %v103 = vsub.s32 0, %v102
    %v104 = vrot.slane %v74, %v103
    %v105 = vlaneseq
    %v106 = vshrl.u32 %v105, 7
    %v107 = vsub.s32 0, %v106
    %v108 = vrot.slane %v76, %v107
    %v109 = vld [vmem:[#allocation2] sm:$0xff]
    %v110 = vld [vmem:[#allocation2 + $0x8] sm:$0xff]
    %v111 = vcombine.low %v80, %v84
    %v112 = vcombine.low %v88, %v92
    %v114 = vunpack.c.l.s4 1983009808
    %v115 = vunpack.c.0.s8 %v114
    %v116 = vlaneseq
    %v117 = vshrl.u32 %v116, 7
    %v118 = vsub.s32 %v115, %v117
    %v119 = vrot.slane %v111, %v118
    %v121 = vunpack.c.l.s4 1983009808
    %v122 = vunpack.c.0.s8 %v121
    %v123 = vlaneseq
    %v124 = vshrl.u32 %v123, 7
    %v125 = vsub.s32 %v122, %v124
    %v126 = vrot.slane %v112, %v125
    %v127 = vcombine.low %v119, %v126
    %v128 = vcombine.low %v96, %v100
    %v129 = vcombine.low %v104, %v108
    %v131 = vunpack.c.l.s4 1983009808
    %v132 = vunpack.c.0.s8 %v131
    %v133 = vlaneseq
    %v134 = vshrl.u32 %v133, 7
    %v135 = vsub.s32 %v132, %v134
    %v136 = vrot.slane %v128, %v135
    %v138 = vunpack.c.l.s4 1983009808
    %v139 = vunpack.c.0.s8 %v138
    %v140 = vlaneseq
    %v141 = vshrl.u32 %v140, 7
    %v142 = vsub.s32 %v139, %v141
    %v143 = vrot.slane %v129, %v142
    %v144 = vcombine.low %v136, %v143
    %v147 = vadd.f32 %v109, %v127
    %v148 = vadd.f32 %v110, %v144
    %149 = vst [vmem:[#allocation5] sm:$0xff] %v147
    %150 = vst [vmem:[#allocation5 + $0x8] sm:$0xff] %v148
    // Predicated region
    $region14: #{positional_encoding_forward.1} parent=1 // pred_check
      _
    $region15: #{positional_encoding_forward.1} parent=1 // pred_check_branch
      %152 = sbr.rel (0) target = $region17
    $region16: #{positional_encoding_forward.1} parent=1 // pred_region
      %s154 = ssub.s32 256, 256
      %155 = vsyncadd [#allocation4], %s154
      %s156 = sshll.u32 [#allocation5], 4
      %s157 = int_to_ptr.vmem [resolvable:$true] %s156
      %162 = dma.vmem_to_hbm [thread:$0]  %s157, 256, %s2, [#allocation4], 128, 128, 8
    $region17: #{positional_encoding_forward.1} parent=1 // pred_fallthru
      _
    // Predicated region
    $region18: #{positional_encoding_forward.1} parent=1 // pred_check
      _
    $region19: #{positional_encoding_forward.1} parent=1 // pred_check_branch
      %164 = sbr.rel (0) target = $region21
    $region20: #{positional_encoding_forward.1} parent=1 // pred_region
      %165 = dma.done [#allocation4], 256
    $region21: #{positional_encoding_forward.1} parent=1 // pred_fallthru
      _
    %166 = vsyncpa [#allocation3], 1
    %167 = vsyncpa [#allocation4], 1

</llo_original>
